<compile_context>
chip_gen: v7x
topology: tpu7x:2x2x1
jax: 0.10.0
libtpu: 0.0.40
codegen_flags: <defaults>
</compile_context>

<pallas_src>
import jax
import jax.numpy as jnp
from jax import lax
from jax.experimental import pallas as pl
from jax.experimental.pallas import tpu as pltpu


def _round_up(x, m):
    return ((x + m - 1) // m) * m


def critic_kernel(s_ref, a_ref, w1s_ref, w1a_ref, b1_ref,
                  w2_ref, b2_ref, w3row_ref, b3_ref, o_ref):
    # fc1 without the concat: x @ W1 == state @ W1_s + action @ W1_a.
    # TODO(synk): merge into a single K=32 MXU pass via a small VMEM scratch
    # concat (low priority: the kernel is DMA/overhead bound, not MXU bound).
    h1 = jnp.dot(s_ref[...], w1s_ref[...], preferred_element_type=jnp.float32)
    h1 = h1 + jnp.dot(a_ref[...], w1a_ref[...], preferred_element_type=jnp.float32)
    h1 = jnp.maximum(h1 + b1_ref[...], 0.0)

    # fc2 (MXU, f32 accumulation) + ReLU (VPU).  Casting to the weight dtype
    # lets the bf16 streaming mode feed the native bf16 MXU path (no-op in f32).
    h2 = jnp.dot(h1.astype(w2_ref.dtype), w2_ref[...],
                 preferred_element_type=jnp.float32) + b2_ref[...]
    h2 = jnp.maximum(h2, 0.0)

    # out: (fc2 -> 1) layer as an MXU contraction producing a lane-dense
    # (1, tb) row -> unmasked full-lane stores, no XLU cross-lane reduce.
    q = lax.dot_general(w3row_ref[...], h2,
                        dimension_numbers=(((1,), (1,)), ((), ())),
                        preferred_element_type=jnp.float32)       # (1, tb)
    o_ref[...] = (q + b3_ref[...]).astype(o_ref.dtype)


def critic_forward(state, action, params, *, tile_b=4096, use_bf16_inputs=False):
    """state: (B, input_dim), action: (B, n_actions) -> (B, 1) float32."""
    w1, b1, w2, b2, w3, b3 = params
    B, input_dim = state.shape
    n_actions = action.shape[1]
    fc1_dim = w1.shape[1]
    fc2_dim = w2.shape[1]

    # Trace-time weight reshapes: split W1 for the concat-free fc1 and lay W3
    # out as a (1, fc2_dim) lane row for the final MXU contraction.
    w1_s = w1[:input_dim, :]
    w1_a = w1[input_dim:, :]
    w3_row = w3.reshape(1, fc2_dim)

    if use_bf16_inputs:
        # Halves the batch-scaling HBM stream and feeds the bf16 MXU path;
        # accumulation stays f32.  Not bit-exact vs. the f32 module.
        state = state.astype(jnp.bfloat16)
        action = action.astype(jnp.bfloat16)
        w1_s = w1_s.astype(jnp.bfloat16)
        w1_a = w1_a.astype(jnp.bfloat16)
        w2 = w2.astype(jnp.bfloat16)

    # Batch tiling:
    #  * Small B: a single full-extent block (always layout-legal; a tiny
    #    forward is launch-latency bound regardless).
    #  * Large B: big 128-multiple tiles (amortize per-step overhead), capped
    #    at ceil(B/2) so the "parallel" axis has >= 2 steps for v7x's two
    #    TensorCores.  The partial edge block is handled by Pallas masking.
    if B <= 256:
        tb = B
    else:
        tb = min(max(128, _round_up(tile_b, 128)),
                 _round_up(pl.cdiv(B, 2), 128))
    num_tiles = pl.cdiv(B, tb)
    total = num_tiles * tb
    grid = (num_tiles,)

    batch_spec = lambda feat: pl.BlockSpec((tb, feat), lambda i: (i, 0))
    full_spec = lambda r, c: pl.BlockSpec((r, c), lambda i: (0, 0))

    out = pl.pallas_call(
        critic_kernel,
        out_shape=jax.ShapeDtypeStruct((1, total), jnp.float32),
        grid=grid,
        in_specs=[
            batch_spec(input_dim),             # state tile
            batch_spec(n_actions),             # action tile
            full_spec(input_dim, fc1_dim),     # W1[:input_dim]
            full_spec(n_actions, fc1_dim),     # W1[input_dim:]
            full_spec(1, fc1_dim),             # b1
            full_spec(fc1_dim, fc2_dim),       # W2
            full_spec(1, fc2_dim),             # b2
            full_spec(1, fc2_dim),             # W3 as lane row
            full_spec(1, 1),                   # b3
        ],
        out_specs=pl.BlockSpec((1, tb), lambda i: (0, i)),
        compiler_params=pltpu.CompilerParams(
            dimension_semantics=("parallel",)),
    )(state, action, w1_s, w1_a, b1, w2, b2, w3_row, b3)

    # Lane-dense (1, num_tiles*tb) row back to the module's (B, 1) layout.
    return out.reshape(-1)[:B].reshape(B, 1)


def init_critic_params(key, input_dim, fc1_dim, fc2_dim, n_actions):
    """Deterministic init mimicking nn.Linear's U[-1/sqrt(fan_in), +...].

    Weights stored (in_features, out_features) for the y = x @ W + b
    convention used by the kernel.
    """
    dims = [(input_dim + n_actions, fc1_dim), (fc1_dim, fc2_dim), (fc2_dim, 1)]
    params = []
    for fan_in, fan_out in dims:
        key, kw, kb = jax.random.split(key, 3)
        bound = 1.0 / (fan_in ** 0.5)
        w = jax.random.uniform(kw, (fan_in, fan_out), jnp.float32, -bound, bound)
        b = jax.random.uniform(kb, (1, fan_out), jnp.float32, -bound, bound)
        params.extend([w, b])
    return tuple(params)


if __name__ == "__main__":
    # Small, forward-consistent shapes.
    batch = 8
    input_dim = 24
    n_actions = 8
    fc1_dim = 64
    fc2_dim = 32

    key = jax.random.PRNGKey(0)
    k_state, k_action, k_params = jax.random.split(key, 3)

    state = jax.random.normal(k_state, (batch, input_dim), jnp.float32)
    action = jax.random.normal(k_action, (batch, n_actions), jnp.float32)
    params = init_critic_params(k_params, input_dim, fc1_dim, fc2_dim, n_actions)

    # Plain-JAX reference of the same forward pass.
    w1, b1, w2, b2, w3, b3 = params
    x = jnp.concatenate([state, action], axis=1)
    ref = jnp.maximum(x @ w1 + b1, 0.0)
    ref = jnp.maximum(ref @ w2 + b2, 0.0)
    ref = ref @ w3 + b3

    # f32 path: numerically matches the PyTorch module's f32 forward.
    q = critic_forward(state, action, params)
    jax.block_until_ready(q)
    assert q.shape == (batch, 1)
    assert jnp.allclose(q, ref, atol=1e-5, rtol=1e-5)

    # bf16 streaming path (perf mode): f32 accumulation, loose tolerance.
    q_bf16 = critic_forward(state, action, params, use_bf16_inputs=True)
    jax.block_until_ready(q_bf16)
    assert q_bf16.shape == (batch, 1)
    assert bool(jnp.all(jnp.isfinite(q_bf16)))
    assert jnp.allclose(q_bf16, ref, atol=5e-2, rtol=5e-2)

    # TODO(synk): for real TD3 use, fuse the twin critics (Q1, Q2) and the
    # min(Q1, Q2)/TD-target math into this same pallas_call (shared
    # state/action tiles, one weight set per TensorCore on v7x) to amortize
    # the DMA stream and launch overhead; a single critic at batch=8 remains
    # launch-latency bound no matter what.

    print("KERNEL_OK")
</pallas_src>

<mosaic_0001>
module attributes {stable_mosaic.version = 11 : i64} {
  func.func @critic_kernel(%arg0: i32, %arg1: memref<8x24xf32, #tpu.memory_space<vmem>>, %arg2: memref<8x8xf32, #tpu.memory_space<vmem>>, %arg3: memref<24x64xf32, #tpu.memory_space<vmem>>, %arg4: memref<8x64xf32, #tpu.memory_space<vmem>>, %arg5: memref<1x64xf32, #tpu.memory_space<vmem>>, %arg6: memref<64x32xf32, #tpu.memory_space<vmem>>, %arg7: memref<1x32xf32, #tpu.memory_space<vmem>>, %arg8: memref<1x32xf32, #tpu.memory_space<vmem>>, %arg9: memref<1x1xf32, #tpu.memory_space<vmem>>, %arg10: memref<1x8xf32, #tpu.memory_space<vmem>>) attributes {dimension_semantics = [#tpu.dimension_semantics<parallel>], iteration_bounds = array<i64: 1>, scalar_prefetch = 0 : i64, scratch_operands = 0 : i64, tpu.core_type = #tpu.core_type<tc>, window_params = [{transform_indices = @transform_0, window_bounds = array<i64: 8, 24>}, {transform_indices = @transform_1, window_bounds = array<i64: 8, 8>}, {pipeline_mode = #tpu.pipeline_mode<synchronous>, transform_indices = @transform_2, window_bounds = array<i64: 24, 64>}, {pipeline_mode = #tpu.pipeline_mode<synchronous>, transform_indices = @transform_3, window_bounds = array<i64: 8, 64>}, {pipeline_mode = #tpu.pipeline_mode<synchronous>, transform_indices = @transform_4, window_bounds = array<i64: 1, 64>}, {pipeline_mode = #tpu.pipeline_mode<synchronous>, transform_indices = @transform_5, window_bounds = array<i64: 64, 32>}, {pipeline_mode = #tpu.pipeline_mode<synchronous>, transform_indices = @transform_6, window_bounds = array<i64: 1, 32>}, {pipeline_mode = #tpu.pipeline_mode<synchronous>, transform_indices = @transform_7, window_bounds = array<i64: 1, 32>}, {pipeline_mode = #tpu.pipeline_mode<synchronous>, transform_indices = @transform_8, window_bounds = array<i64: 1, 1>}, {transform_indices = @transform_9, window_bounds = array<i64: 1, 8>}]} {
    %c0 = arith.constant 0 : index
    %c0_0 = arith.constant 0 : index
    %0 = vector.load %arg1[%c0, %c0_0] : memref<8x24xf32, #tpu.memory_space<vmem>>, vector<8x24xf32>
    %c0_1 = arith.constant 0 : index
    %c0_2 = arith.constant 0 : index
    %1 = vector.load %arg3[%c0_1, %c0_2] : memref<24x64xf32, #tpu.memory_space<vmem>>, vector<24x64xf32>
    %cst = arith.constant dense<0.000000e+00> : vector<8x64xf32>
    %2 = tpu.matmul %0, %1, %cst {dimension_numbers = #tpu.dot_dimension_numbers<[1], [0], [0], [1], [0, 0, 1, 1], [], []>} : vector<8x24xf32>, vector<24x64xf32>, vector<8x64xf32> -> vector<8x64xf32>
    %c0_3 = arith.constant 0 : index
    %c0_4 = arith.constant 0 : index
    %3 = vector.load %arg2[%c0_3, %c0_4] : memref<8x8xf32, #tpu.memory_space<vmem>>, vector<8x8xf32>
    %c0_5 = arith.constant 0 : index
    %c0_6 = arith.constant 0 : index
    %4 = vector.load %arg4[%c0_5, %c0_6] : memref<8x64xf32, #tpu.memory_space<vmem>>, vector<8x64xf32>
    %cst_7 = arith.constant dense<0.000000e+00> : vector<8x64xf32>
    %5 = tpu.matmul %3, %4, %cst_7 {dimension_numbers = #tpu.dot_dimension_numbers<[1], [0], [0], [1], [0, 0, 1, 1], [], []>} : vector<8x8xf32>, vector<8x64xf32>, vector<8x64xf32> -> vector<8x64xf32>
    %6 = arith.addf %2, %5 : vector<8x64xf32>
    %c0_8 = arith.constant 0 : index
    %c0_9 = arith.constant 0 : index
    %7 = vector.load %arg5[%c0_8, %c0_9] : memref<1x64xf32, #tpu.memory_space<vmem>>, vector<1x64xf32>
    %8 = vector.broadcast %7 : vector<1x64xf32> to vector<8x64xf32>
    %9 = arith.addf %6, %8 : vector<8x64xf32>
    %cst_10 = arith.constant 0.000000e+00 : f32
    %10 = vector.broadcast %cst_10 : f32 to vector<8x64xf32>
    %11 = arith.maximumf %9, %10 : vector<8x64xf32>
    %c0_11 = arith.constant 0 : index
    %c0_12 = arith.constant 0 : index
    %12 = vector.load %arg6[%c0_11, %c0_12] : memref<64x32xf32, #tpu.memory_space<vmem>>, vector<64x32xf32>
    %cst_13 = arith.constant dense<0.000000e+00> : vector<8x32xf32>
    %13 = tpu.matmul %11, %12, %cst_13 {dimension_numbers = #tpu.dot_dimension_numbers<[1], [0], [0], [1], [0, 0, 1, 1], [], []>} : vector<8x64xf32>, vector<64x32xf32>, vector<8x32xf32> -> vector<8x32xf32>
    %c0_14 = arith.constant 0 : index
    %c0_15 = arith.constant 0 : index
    %14 = vector.load %arg7[%c0_14, %c0_15] : memref<1x32xf32, #tpu.memory_space<vmem>>, vector<1x32xf32>
    %15 = vector.broadcast %14 : vector<1x32xf32> to vector<8x32xf32>
    %16 = arith.addf %13, %15 : vector<8x32xf32>
    %cst_16 = arith.constant 0.000000e+00 : f32
    %17 = vector.broadcast %cst_16 : f32 to vector<8x32xf32>
    %18 = arith.maximumf %16, %17 : vector<8x32xf32>
    %c0_17 = arith.constant 0 : index
    %c0_18 = arith.constant 0 : index
    %19 = vector.load %arg8[%c0_17, %c0_18] : memref<1x32xf32, #tpu.memory_space<vmem>>, vector<1x32xf32>
    %cst_19 = arith.constant dense<0.000000e+00> : vector<1x8xf32>
    %20 = tpu.matmul %19, %18, %cst_19 {dimension_numbers = #tpu.dot_dimension_numbers<[1], [1], [0], [0], [0, 0, 1, 0], [], []>} : vector<1x32xf32>, vector<8x32xf32>, vector<1x8xf32> -> vector<1x8xf32>
    %c0_20 = arith.constant 0 : index
    %c0_21 = arith.constant 0 : index
    %21 = vector.load %arg9[%c0_20, %c0_21] : memref<1x1xf32, #tpu.memory_space<vmem>>, vector<1x1xf32>
    %22 = vector.broadcast %21 : vector<1x1xf32> to vector<1x8xf32>
    %23 = arith.addf %20, %22 : vector<1x8xf32>
    %c0_22 = arith.constant 0 : index
    %c0_23 = arith.constant 0 : index
    %24 = vector.load %arg10[%c0_22, %c0_23] : memref<1x8xf32, #tpu.memory_space<vmem>>, vector<1x8xf32>
    tpu.vector_store %arg10[%c0_22, %c0_23], %23 {strides = array<i32>} : memref<1x8xf32, #tpu.memory_space<vmem>>, vector<1x8xf32>,
    return
  }
  func.func @transform_0(%arg0: i32) -> (i32, i32) {
    %c0_i32 = arith.constant 0 : i32
    %c0_i32_0 = arith.constant 0 : i32
    return %arg0, %c0_i32 : i32, i32
  }
  func.func @transform_1(%arg0: i32) -> (i32, i32) {
    %c0_i32 = arith.constant 0 : i32
    %c0_i32_0 = arith.constant 0 : i32
    return %arg0, %c0_i32 : i32, i32
  }
  func.func @transform_2(%arg0: i32) -> (i32, i32) {
    %c0_i32 = arith.constant 0 : i32
    %c0_i32_0 = arith.constant 0 : i32
    %c0_i32_1 = arith.constant 0 : i32
    return %c0_i32, %c0_i32_0 : i32, i32
  }
  func.func @transform_3(%arg0: i32) -> (i32, i32) {
    %c0_i32 = arith.constant 0 : i32
    %c0_i32_0 = arith.constant 0 : i32
    %c0_i32_1 = arith.constant 0 : i32
    return %c0_i32, %c0_i32_0 : i32, i32
  }
  func.func @transform_4(%arg0: i32) -> (i32, i32) {
    %c0_i32 = arith.constant 0 : i32
    %c0_i32_0 = arith.constant 0 : i32
    %c0_i32_1 = arith.constant 0 : i32
    return %c0_i32, %c0_i32_0 : i32, i32
  }
  func.func @transform_5(%arg0: i32) -> (i32, i32) {
    %c0_i32 = arith.constant 0 : i32
    %c0_i32_0 = arith.constant 0 : i32
    %c0_i32_1 = arith.constant 0 : i32
    return %c0_i32, %c0_i32_0 : i32, i32
  }
  func.func @transform_6(%arg0: i32) -> (i32, i32) {
    %c0_i32 = arith.constant 0 : i32
    %c0_i32_0 = arith.constant 0 : i32
    %c0_i32_1 = arith.constant 0 : i32
    return %c0_i32, %c0_i32_0 : i32, i32
  }
  func.func @transform_7(%arg0: i32) -> (i32, i32) {
    %c0_i32 = arith.constant 0 : i32
    %c0_i32_0 = arith.constant 0 : i32
    %c0_i32_1 = arith.constant 0 : i32
    return %c0_i32, %c0_i32_0 : i32, i32
  }
  func.func @transform_8(%arg0: i32) -> (i32, i32) {
    %c0_i32 = arith.constant 0 : i32
    %c0_i32_0 = arith.constant 0 : i32
    %c0_i32_1 = arith.constant 0 : i32
    return %c0_i32, %c0_i32_0 : i32, i32
  }
  func.func @transform_9(%arg0: i32) -> (i32, i32) {
    %c0_i32 = arith.constant 0 : i32
    %c0_i32_0 = arith.constant 0 : i32
    return %c0_i32, %arg0 : i32, i32
  }
}

</mosaic_0001>

<llo_original>
// kernel: tpu_custom_call.1
$region0: #{tpu_custom_call.1}
  #allocation0 [shape = 'u32[]', space=smem, size = 0x4, offset = 0x4, fixed_abs, tag = 'smem constant byte address 0x4 - core index']
  #allocation1 [shape = 'u32[144,128]{1,0:T(1,128)}', space=vmem, size = 0x12000, scoped, tag = 'internal scratch']
  #allocation2 [shape = 'f32[1,1]{1,0:T(1,128)S(1)}', space=vmem, size = 0x200, scoped, tag = 'scoped memory for tpu_custom_call.1']
  %s0 = inlined_call_operand.vmem [shape: f32[8,24], index: 0, kind: input, shape index: {}]
  %s1 = inlined_call_operand.vmem [shape: f32[8,8], index: 1, kind: input, shape index: {}]
  %s2 = inlined_call_operand.vmem [shape: f32[24,64], index: 2, kind: input, shape index: {}]
  %s3 = inlined_call_operand.vmem [shape: f32[8,64], index: 3, kind: input, shape index: {}]
  %s4 = inlined_call_operand.vmem [shape: f32[1,64], index: 4, kind: input, shape index: {}]
  %s5 = inlined_call_operand.vmem [shape: f32[64,32], index: 5, kind: input, shape index: {}]
  %s6 = inlined_call_operand.vmem [shape: f32[1,32], index: 6, kind: input, shape index: {}]
  %s7 = inlined_call_operand.vmem [shape: f32[1,32], index: 7, kind: input, shape index: {}]
  %s8 = inlined_call_operand.<no memory space> [shape: f32[1,1], index: 8, kind: input, shape index: {}]
  %s9 = inlined_call_operand.hbm [shape: f32[1,8], index: 9, kind: output, shape index: {}]
  %s10 = sld [smem:[#allocation0]]
  $region46: #{tpu_custom_call.1} parent=0
    _
  %s12 = ssub.s32 1, %s10
  %s13 = scalar_select 0, %s12, %s10
  %v14 = vstv %s8
  %15 = vst [vmem:[#allocation2] sm:$0x1] %v14
  $region1: #{tpu_custom_call.1} parent=0
    #allocation3 [shape = 'u8[512]{0}', space=vmem, size = 0x400, scoped, tag = 'output window, operand 0, single buffered']
    #allocation4 [shape = 's32[1]{0}', space=sflag, size = 0x4, scoped, tag = 'scoped memory for tpu_custom_call.1']
    %16 = vsyncpa [#allocation4], 0
    // Predicated region
    $region2: #{tpu_custom_call.1} parent=1 // pred_check
      _
    $region3: #{tpu_custom_call.1} parent=1 // pred_check_branch
      %18 = sbr.rel (0) target = $region5
    $region4: #{tpu_custom_call.1} parent=1 // pred_region
      _
    $region5: #{tpu_custom_call.1} parent=1 // pred_fallthru
      _
    // Predicated region
    $region6: #{tpu_custom_call.1} parent=1 // pred_check
      _
    $region7: #{tpu_custom_call.1} parent=1 // pred_check_branch
      %20 = sbr.rel (0) target = $region9
    $region8: #{tpu_custom_call.1} parent=1 // pred_region
      _
    $region9: #{tpu_custom_call.1} parent=1 // pred_fallthru
      _
    // Predicated region
    $region10: #{tpu_custom_call.1} parent=1 // pred_check
      _
    $region11: #{tpu_custom_call.1} parent=1 // pred_check_branch
      %22 = sbr.rel (0) target = $region13
    $region12: #{tpu_custom_call.1} parent=1 // pred_region
      _
    $region13: #{tpu_custom_call.1} parent=1 // pred_fallthru
      _
    // Predicated region
    $region14: #{tpu_custom_call.1} parent=1 // pred_check
      _
    $region15: #{tpu_custom_call.1} parent=1 // pred_check_branch
      %24 = sbr.rel (0) target = $region17
    $region16: #{tpu_custom_call.1} parent=1 // pred_region
      _
    $region17: #{tpu_custom_call.1} parent=1 // pred_fallthru
      _
    // Predicated region
    $region18: #{tpu_custom_call.1} parent=1 // pred_check
      _
    $region19: #{tpu_custom_call.1} parent=1 // pred_check_branch
      %26 = sbr.rel (0) target = $region21
    $region20: #{tpu_custom_call.1} parent=1 // pred_region
      _
    $region21: #{tpu_custom_call.1} parent=1 // pred_fallthru
      _
    // Predicated region
    $region22: #{tpu_custom_call.1} parent=1 // pred_check
      _
    $region23: #{tpu_custom_call.1} parent=1 // pred_check_branch
      %28 = sbr.rel (0) target = $region25
    $region24: #{tpu_custom_call.1} parent=1 // pred_region
      _
    $region25: #{tpu_custom_call.1} parent=1 // pred_fallthru
      _
    // Predicated region
    $region26: #{tpu_custom_call.1} parent=1 // pred_check
      _
    $region27: #{tpu_custom_call.1} parent=1 // pred_check_branch
      %30 = sbr.rel (0) target = $region29
    $region28: #{tpu_custom_call.1} parent=1 // pred_region
      _
    $region29: #{tpu_custom_call.1} parent=1 // pred_fallthru
      _
    // Predicated region
    $region30: #{tpu_custom_call.1} parent=1 // pred_check
      _
    $region31: #{tpu_custom_call.1} parent=1 // pred_check_branch
      %32 = sbr.rel (0) target = $region33
    $region32: #{tpu_custom_call.1} parent=1 // pred_region
      _
    $region33: #{tpu_custom_call.1} parent=1 // pred_fallthru
      _
    // Predicated region
    $region34: #{tpu_custom_call.1} parent=1 // pred_check
      _
    $region35: #{tpu_custom_call.1} parent=1 // pred_check_branch
      %34 = sbr.rel (0) target = $region37
    $region36: #{tpu_custom_call.1} parent=1 // pred_region
      _
    $region37: #{tpu_custom_call.1} parent=1 // pred_fallthru
      _
    %v35 = vld [vmem:[%s0] sm:$0xff]
    %v36 = vld [vmem:[%s2] sm:$0xff]
    %v37 = vld [vmem:[%s2 + $0x8] sm:$0xff]
    %v38 = vld [vmem:[%s2 + $0x10] sm:$0xff]
    %v39 = vld [vmem:[%s1] sm:$0xff]
    %v40 = vld [vmem:[%s3] sm:$0xff]
    %vm41 = vcmask 64512
    %v43 = vsel %vm41, %v39, 0
    %45 = vmatprep.subr.mxu0 0.0
    %46 = vmatpush1.msra.mxu0 %v40
    %47 = vmatprep.subr.mxu0 0.0
    %48 = vmatpush1.msra.mxu0 0.0
    %49 = vmatprep.subr.mxu0 0.0
    %50 = vmatpush1.msra.mxu0 0.0
    %51 = vmatprep.subr.mxu0 0.0
    %52 = vmatpush1.msra.mxu0 0.0
    %53 = vmatprep.subr.mxu0 0.0
    %54 = vmatpush1.msra.mxu0 0.0
    %55 = vmatprep.subr.mxu0 0.0
    %56 = vmatpush1.msra.mxu0 0.0
    %57 = vmatprep.subr.mxu0 0.0
    %58 = vmatpush1.msra.mxu0 0.0
    %59 = vmatprep.subr.mxu0 0.0
    %60 = vmatpush1.msra.mxu0 0.0
    %61 = vmatprep.subr.mxu0 0.0
    %62 = vmatpush1.msra.mxu0 0.0
    %63 = vmatprep.subr.mxu0 0.0
    %64 = vmatpush1.msra.mxu0 0.0
    %65 = vmatprep.subr.mxu0 0.0
    %66 = vmatpush1.msra.mxu0 0.0
    %67 = vmatprep.subr.mxu0 0.0
    %68 = vmatpush1.msra.mxu0 0.0
    %69 = vmatprep.subr.mxu0 0.0
    %70 = vmatpush1.msra.mxu0 0.0
    %71 = vmatprep.subr.mxu0 0.0
    %72 = vmatpush1.msra.mxu0 0.0
    %73 = vmatprep.subr.mxu0 0.0
    %74 = vmatpush1.msra.mxu0 0.0
    %75 = vmatprep.subr.mxu0 0.0
    %76 = vmatpush1.msra.mxu0 0.0
    %77 = vmatprep.subr.mxu0 0.0
    %78 = vmatpush1.msra.mxu0 0.0
    %79 = vmatprep.subr.mxu0 0.0
    %80 = vmatpush1.msra.mxu0 0.0
    %81 = vmatprep.subr.mxu0 0.0
    %82 = vmatpush1.msra.mxu0 0.0
    %83 = vmatprep.subr.mxu0 0.0
    %84 = vmatpush1.msra.mxu0 0.0
    %85 = vmatprep.subr.mxu0 0.0
    %86 = vmatpush1.msra.mxu0 0.0
    %87 = vmatprep.subr.mxu0 0.0
    %88 = vmatpush1.msra.mxu0 0.0
    %89 = vmatprep.subr.mxu0 0.0
    %90 = vmatpush1.msra.mxu0 0.0
    %91 = vmatprep.subr.mxu0 0.0
    %92 = vmatpush1.msra.mxu0 0.0
    %93 = vmatprep.subr.mxu0 0.0
    %94 = vmatpush1.msra.mxu0 0.0
    %95 = vmatprep.subr.mxu0 0.0
    %96 = vmatpush1.msra.mxu0 0.0
    %97 = vmatprep.subr.mxu0 0.0
    %98 = vmatpush1.msra.mxu0 0.0
    %99 = vmatprep.subr.mxu0 0.0
    %100 = vmatpush1.msra.mxu0 0.0
    %101 = vmatprep.subr.mxu0 0.0
    %102 = vmatpush1.msra.mxu0 0.0
    %103 = vmatprep.subr.mxu0 0.0
    %104 = vmatpush1.msra.mxu0 0.0
    %105 = vmatprep.subr.mxu0 0.0
    %106 = vmatpush1.msra.mxu0 0.0
    %107 = vmatprep.subr.mxu0 0.0
    %108 = vmatpush1.msra.mxu0 0.0
    %109 = vmatprep.mubr.f32.mxu0 0.0
    %110 = vmatmul.mubr.f32.gmra.mrb[0].mxu0 %v43
    %v111 = vpop.f32.mrb[0].mxu0
    %v112 = vadd.f32 0.0, %v111
    %v113 = vpop.f32.mrb[0].mxu0
    %114 = vdwg.mxu0
    %vm115 = vcmask 195584
    %v117 = vsel %vm115, %v35, 0
    %119 = vmatprep.subr.mxu0 0.0
    %120 = vmatpush1.msra.mxu0 %v36
    %121 = vmatprep.subr.mxu0 0.0
    %122 = vmatpush1.msra.mxu0 %v37
    %123 = vmatprep.subr.mxu0 0.0
    %124 = vmatpush1.msra.mxu0 %v38
    %125 = vmatprep.subr.mxu0 0.0
    %126 = vmatpush1.msra.mxu0 0.0
    %127 = vmatprep.subr.mxu0 0.0
    %128 = vmatpush1.msra.mxu0 0.0
    %129 = vmatprep.subr.mxu0 0.0
    %130 = vmatpush1.msra.mxu0 0.0
    %131 = vmatprep.subr.mxu0 0.0
    %132 = vmatpush1.msra.mxu0 0.0
    %133 = vmatprep.subr.mxu0 0.0
    %134 = vmatpush1.msra.mxu0 0.0
    %135 = vmatprep.subr.mxu0 0.0
    %136 = vmatpush1.msra.mxu0 0.0
    %137 = vmatprep.subr.mxu0 0.0
    %138 = vmatpush1.msra.mxu0 0.0
    %139 = vmatprep.subr.mxu0 0.0
    %140 = vmatpush1.msra.mxu0 0.0
    %141 = vmatprep.subr.mxu0 0.0
    %142 = vmatpush1.msra.mxu0 0.0
    %143 = vmatprep.subr.mxu0 0.0
    %144 = vmatpush1.msra.mxu0 0.0
    %145 = vmatprep.subr.mxu0 0.0
    %146 = vmatpush1.msra.mxu0 0.0
    %147 = vmatprep.subr.mxu0 0.0
    %148 = vmatpush1.msra.mxu0 0.0
    %149 = vmatprep.subr.mxu0 0.0
    %150 = vmatpush1.msra.mxu0 0.0
    %151 = vmatprep.subr.mxu0 0.0
    %152 = vmatpush1.msra.mxu0 0.0
    %153 = vmatprep.subr.mxu0 0.0
    %154 = vmatpush1.msra.mxu0 0.0
    %155 = vmatprep.subr.mxu0 0.0
    %156 = vmatpush1.msra.mxu0 0.0
    %157 = vmatprep.subr.mxu0 0.0
    %158 = vmatpush1.msra.mxu0 0.0
    %159 = vmatprep.subr.mxu0 0.0
    %160 = vmatpush1.msra.mxu0 0.0
    %161 = vmatprep.subr.mxu0 0.0
    %162 = vmatpush1.msra.mxu0 0.0
    %163 = vmatprep.subr.mxu0 0.0
    %164 = vmatpush1.msra.mxu0 0.0
    %165 = vmatprep.subr.mxu0 0.0
    %166 = vmatpush1.msra.mxu0 0.0
    %167 = vmatprep.subr.mxu0 0.0
    %168 = vmatpush1.msra.mxu0 0.0
    %169 = vmatprep.subr.mxu0 0.0
    %170 = vmatpush1.msra.mxu0 0.0
    %171 = vmatprep.subr.mxu0 0.0
    %172 = vmatpush1.msra.mxu0 0.0
    %173 = vmatprep.subr.mxu0 0.0
    %174 = vmatpush1.msra.mxu0 0.0
    %175 = vmatprep.subr.mxu0 0.0
    %176 = vmatpush1.msra.mxu0 0.0
    %177 = vmatprep.subr.mxu0 0.0
    %178 = vmatpush1.msra.mxu0 0.0
    %179 = vmatprep.subr.mxu0 0.0
    %180 = vmatpush1.msra.mxu0 0.0
    %181 = vmatprep.subr.mxu0 0.0
    %182 = vmatpush1.msra.mxu0 0.0
    %183 = vmatprep.mubr.f32.mxu0 0.0
    %184 = vmatmul.mubr.f32.gmra.mrb[0].mxu0 %v117
    %v185 = vpop.f32.mrb[0].mxu0
    %v186 = vadd.f32 %v112, %v185
    %v187 = vpop.f32.mrb[0].mxu0
    %188 = vdwg.mxu0
    %v189 = vld [vmem:[%s4] sm:$0x1]
    %v191 = vlaneseq
    %v192 = vshrl.u32 %v191, 7
    %v193 = vsub.s32 0, %v192
    %v194 = vrot.slane %v189, %v193
    %v196 = vadd.f32 %v186, %v194
    %v197 = vmax.f32 %v196, 0.0
    %v198 = vld [vmem:[%s5] sm:$0xff]
    %v199 = vld [vmem:[%s5 + $0x8] sm:$0xff]
    %v200 = vld [vmem:[%s5 + $0x10] sm:$0xff]
    %v201 = vld [vmem:[%s5 + $0x18] sm:$0xff]
    %v202 = vld [vmem:[%s5 + $0x20] sm:$0xff]
    %v203 = vld [vmem:[%s5 + $0x28] sm:$0xff]
    %v204 = vld [vmem:[%s5 + $0x30] sm:$0xff]
    %v205 = vld [vmem:[%s5 + $0x38] sm:$0xff]
    %v206 = vld [vmem:[%s6] sm:$0x1]
    %v208 = vlaneseq
    %v209 = vshrl.u32 %v208, 7
    %v210 = vsub.s32 0, %v209
    %v211 = vrot.slane %v206, %v210
    %vm213 = vcmask 523264
    %v215 = vsel %vm213, %v197, 0
    %217 = vmatprep.subr.mxu0 0.0
    %218 = vmatpush1.msra.mxu0 %v198
    %219 = vmatprep.subr.mxu0 0.0
    %220 = vmatpush1.msra.mxu0 %v199
    %221 = vmatprep.subr.mxu0 0.0
    %222 = vmatpush1.msra.mxu0 %v200
    %223 = vmatprep.subr.mxu0 0.0
    %224 = vmatpush1.msra.mxu0 %v201
    %225 = vmatprep.subr.mxu0 0.0
    %226 = vmatpush1.msra.mxu0 %v202
    %227 = vmatprep.subr.mxu0 0.0
    %228 = vmatpush1.msra.mxu0 %v203
    %229 = vmatprep.subr.mxu0 0.0
    %230 = vmatpush1.msra.mxu0 %v204
    %231 = vmatprep.subr.mxu0 0.0
    %232 = vmatpush1.msra.mxu0 %v205
    %233 = vmatprep.subr.mxu0 0.0
    %234 = vmatpush1.msra.mxu0 0.0
    %235 = vmatprep.subr.mxu0 0.0
    %236 = vmatpush1.msra.mxu0 0.0
    %237 = vmatprep.subr.mxu0 0.0
    %238 = vmatpush1.msra.mxu0 0.0
    %239 = vmatprep.subr.mxu0 0.0
    %240 = vmatpush1.msra.mxu0 0.0
    %241 = vmatprep.subr.mxu0 0.0
    %242 = vmatpush1.msra.mxu0 0.0
    %243 = vmatprep.subr.mxu0 0.0
    %244 = vmatpush1.msra.mxu0 0.0
    %245 = vmatprep.subr.mxu0 0.0
    %246 = vmatpush1.msra.mxu0 0.0
    %247 = vmatprep.subr.mxu0 0.0
    %248 = vmatpush1.msra.mxu0 0.0
    %249 = vmatprep.subr.mxu0 0.0
    %250 = vmatpush1.msra.mxu0 0.0
    %251 = vmatprep.subr.mxu0 0.0
    %252 = vmatpush1.msra.mxu0 0.0
    %253 = vmatprep.subr.mxu0 0.0
    %254 = vmatpush1.msra.mxu0 0.0
    %255 = vmatprep.subr.mxu0 0.0
    %256 = vmatpush1.msra.mxu0 0.0
    %257 = vmatprep.subr.mxu0 0.0
    %258 = vmatpush1.msra.mxu0 0.0
    %259 = vmatprep.subr.mxu0 0.0
    %260 = vmatpush1.msra.mxu0 0.0
    %261 = vmatprep.subr.mxu0 0.0
    %262 = vmatpush1.msra.mxu0 0.0
    %263 = vmatprep.subr.mxu0 0.0
    %264 = vmatpush1.msra.mxu0 0.0
    %265 = vmatprep.subr.mxu0 0.0
    %266 = vmatpush1.msra.mxu0 0.0
    %267 = vmatprep.subr.mxu0 0.0
    %268 = vmatpush1.msra.mxu0 0.0
    %269 = vmatprep.subr.mxu0 0.0
    %270 = vmatpush1.msra.mxu0 0.0
    %271 = vmatprep.subr.mxu0 0.0
    %272 = vmatpush1.msra.mxu0 0.0
    %273 = vmatprep.subr.mxu0 0.0
    %274 = vmatpush1.msra.mxu0 0.0
    %275 = vmatprep.subr.mxu0 0.0
    %276 = vmatpush1.msra.mxu0 0.0
    %277 = vmatprep.subr.mxu0 0.0
    %278 = vmatpush1.msra.mxu0 0.0
    %279 = vmatprep.subr.mxu0 0.0
    %280 = vmatpush1.msra.mxu0 0.0
    %281 = vmatprep.mubr.f32.mxu0 0.0
    %282 = vmatmul.mubr.f32.gmra.mrb[0].mxu0 %v215
    %v283 = vpop.f32.mrb[0].mxu0
    %v284 = vadd.f32 %v211, %v283
    %v285 = vpop.f32.mrb[0].mxu0
    %286 = vdwg.mxu0
    %v287 = vmax.f32 %v284, 0.0
    %v288 = vld [vmem:[%s7] sm:$0x1]
    %v289 = vld [vmem:[#allocation2] sm:$0x1]
    %291 = vset.pattern.permute.xlu0 0
    %292 = vperm.xlu0 %291, %v289
    %v293 = vpop.permute.xlu0 %292
    %v295 = vlaneseq
    %v296 = vshrl.u32 %v295, 7
    %v297 = vsub.s32 0, %v296
    %v298 = vrot.slane %v293, %v297
    %vm299 = vcmask 261120
    %v301 = vsel %vm299, %v288, 0
    %v304 = vsel %vm299, %v287, 0
    %306 = vmatprep.subr.mxu0 0.0
    %307 = vmatpush1.xpose.msra.mxu0 %v304
    %308 = vmatprep.subr.mxu0 0.0
    %309 = vmatpush1.xpose.msra.mxu0 0.0
    %310 = vmatprep.subr.mxu0 0.0
    %311 = vmatpush1.xpose.msra.mxu0 0.0
    %312 = vmatprep.subr.mxu0 0.0
    %313 = vmatpush1.xpose.msra.mxu0 0.0
    %314 = vmatprep.subr.mxu0 0.0
    %315 = vmatpush1.xpose.msra.mxu0 0.0
    %316 = vmatprep.subr.mxu0 0.0
    %317 = vmatpush1.xpose.msra.mxu0 0.0
    %318 = vmatprep.subr.mxu0 0.0
    %319 = vmatpush1.xpose.msra.mxu0 0.0
    %320 = vmatprep.subr.mxu0 0.0
    %321 = vmatpush1.xpose.msra.mxu0 0.0
    %322 = vmatprep.subr.mxu0 0.0
    %323 = vmatpush1.xpose.msra.mxu0 0.0
    %324 = vmatprep.subr.mxu0 0.0
    %325 = vmatpush1.xpose.msra.mxu0 0.0
    %326 = vmatprep.subr.mxu0 0.0
    %327 = vmatpush1.xpose.msra.mxu0 0.0
    %328 = vmatprep.subr.mxu0 0.0
    %329 = vmatpush1.xpose.msra.mxu0 0.0
    %330 = vmatprep.subr.mxu0 0.0
    %331 = vmatpush1.xpose.msra.mxu0 0.0
    %332 = vmatprep.subr.mxu0 0.0
    %333 = vmatpush1.xpose.msra.mxu0 0.0
    %334 = vmatprep.subr.mxu0 0.0
    %335 = vmatpush1.xpose.msra.mxu0 0.0
    %336 = vmatprep.subr.mxu0 0.0
    %337 = vmatpush1.xpose.msra.mxu0 0.0
    %338 = vmatprep.subr.mxu0 0.0
    %339 = vmatpush1.xpose.msra.mxu0 0.0
    %340 = vmatprep.subr.mxu0 0.0
    %341 = vmatpush1.xpose.msra.mxu0 0.0
    %342 = vmatprep.subr.mxu0 0.0
    %343 = vmatpush1.xpose.msra.mxu0 0.0
    %344 = vmatprep.subr.mxu0 0.0
    %345 = vmatpush1.xpose.msra.mxu0 0.0
    %346 = vmatprep.subr.mxu0 0.0
    %347 = vmatpush1.xpose.msra.mxu0 0.0
    %348 = vmatprep.subr.mxu0 0.0
    %349 = vmatpush1.xpose.msra.mxu0 0.0
    %350 = vmatprep.subr.mxu0 0.0
    %351 = vmatpush1.xpose.msra.mxu0 0.0
    %352 = vmatprep.subr.mxu0 0.0
    %353 = vmatpush1.xpose.msra.mxu0 0.0
    %354 = vmatprep.subr.mxu0 0.0
    %355 = vmatpush1.xpose.msra.mxu0 0.0
    %356 = vmatprep.subr.mxu0 0.0
    %357 = vmatpush1.xpose.msra.mxu0 0.0
    %358 = vmatprep.subr.mxu0 0.0
    %359 = vmatpush1.xpose.msra.mxu0 0.0
    %360 = vmatprep.subr.mxu0 0.0
    %361 = vmatpush1.xpose.msra.mxu0 0.0
    %362 = vmatprep.subr.mxu0 0.0
    %363 = vmatpush1.xpose.msra.mxu0 0.0
    %364 = vmatprep.subr.mxu0 0.0
    %365 = vmatpush1.xpose.msra.mxu0 0.0
    %366 = vmatprep.subr.mxu0 0.0
    %367 = vmatpush1.xpose.msra.mxu0 0.0
    %368 = vmatprep.subr.mxu0 0.0
    %369 = vmatpush1.xpose.msra.mxu0 0.0
    %370 = vmatprep.mubr.f32.mxu0 0.0
    %371 = vmatmul.mubr.f32.gmra.mrb[0].mxu0 %v301
    %v372 = vpop.f32.mrb[0].mxu0
    %v373 = vadd.f32 %v298, %v372
    %v374 = vpop.f32.mrb[0].mxu0
    %375 = vdwg.mxu0
    %vm376 = vcmask 57344
    %377 = vst.msk [vmem:[#allocation3] sm:$0x1] %vm376, %v373
    // Predicated region
    $region38: #{tpu_custom_call.1} parent=1 // pred_check
      _
    $region39: #{tpu_custom_call.1} parent=1 // pred_check_branch
      %379 = sbr.rel (0) target = $region41
    $region40: #{tpu_custom_call.1} parent=1 // pred_region
      %s381 = ssub.s32 16, 16
      %382 = vsyncadd [#allocation4], %s381
      %s384 = sshll.u32 [#allocation3], 4
      %s385 = int_to_ptr.vmem [resolvable:$true] %s384
      %387 = dma.vmem_to_hbm [thread:$0]  %s385, 16, %s9, [#allocation4]
    $region41: #{tpu_custom_call.1} parent=1 // pred_fallthru
      _
    // Predicated region
    $region42: #{tpu_custom_call.1} parent=1 // pred_check
      _
    $region43: #{tpu_custom_call.1} parent=1 // pred_check_branch
      %389 = sbr.rel (0) target = $region45
    $region44: #{tpu_custom_call.1} parent=1 // pred_region
      %390 = dma.done [#allocation4], 16
    $region45: #{tpu_custom_call.1} parent=1 // pred_fallthru
      _
    %391 = vsyncpa [#allocation4], 1

</llo_original>
